<compile_context>
chip_gen: v5e
topology: v5e:2x2
jax: 0.10.0
libtpu: 0.0.40
codegen_flags: <defaults>
</compile_context>

<pallas_src>
import math
import functools

import jax
import jax.numpy as jnp
from jax.experimental import pallas as pl
from jax.experimental.pallas import tpu as pltpu

LANE = 128
SUBLANE = 8


def _round_up(n, m):
    return ((n + m - 1) // m) * m


def _cdiv(a, b):
    return (a + b - 1) // b


def _softplus(x):
    # Numerically-safe softplus (== F.softplus): max(x,0) + log1p(exp(-|x|)).
    return jnp.maximum(x, 0.0) + jnp.log1p(jnp.exp(-jnp.abs(x)))


# ---------------------------------------------------------------------------
# Prologue kernel: perturb ONE layer's parameters ONCE per forward pass.
#   W = w_mu + softplus(w_rho) * eps_W   -> bf16, (in_p, out_p) layout
#   b = b_mu + softplus(b_rho) * eps_b   -> f32,  (1, out_p)
# Tiled over weight rows; the bias is written on the first grid step only.
# ---------------------------------------------------------------------------
def _perturb_kernel(wmu_ref, wrho_ref, epsw_ref, bmu_ref, brho_ref, epsb_ref,
                    w_ref, b_ref):
    w = wmu_ref[...] + _softplus(wrho_ref[...]) * epsw_ref[...]
    w_ref[...] = w.astype(w_ref.dtype)

    @pl.when(pl.program_id(0) == 0)
    def _():
        b = bmu_ref[...] + _softplus(brho_ref[...]) * epsb_ref[...]
        b_ref[...] = b.astype(b_ref.dtype)


def _perturb_layer(w_mu_p, w_rho_p, eps_w_p, b_mu_p, b_rho_p, eps_b_p):
    in_p, out_p = w_mu_p.shape
    tr = min(in_p, LANE)                       # in_p is a multiple of 128
    grid = (in_p // tr,)
    row_spec = pl.BlockSpec((tr, out_p), lambda r: (r, 0))
    vec_spec = pl.BlockSpec((1, out_p), lambda r: (0, 0))
    return pl.pallas_call(
        _perturb_kernel,
        grid=grid,
        in_specs=[row_spec, row_spec, row_spec, vec_spec, vec_spec, vec_spec],
        out_specs=(row_spec, vec_spec),
        out_shape=(jax.ShapeDtypeStruct((in_p, out_p), jnp.bfloat16),
                   jax.ShapeDtypeStruct((1, out_p), jnp.float32)),
        compiler_params=pltpu.CompilerParams(
            dimension_semantics=("arbitrary",),
            vmem_limit_bytes=64 * 1024 * 1024),
    )(w_mu_p, w_rho_p, eps_w_p, b_mu_p, b_rho_p, eps_b_p)


# ---------------------------------------------------------------------------
# Main kernel: full MLP on one batch tile; activations stay in VMEM between
# layers.  Weights are pre-perturbed bf16 (in_p, out_p), biases f32 (1, out_p).
# ---------------------------------------------------------------------------
def _bnn_mlp_kernel(*refs, n_layers):
    x_ref, o_ref = refs[0], refs[-1]
    h = x_ref[...]                                       # (tb, in_p0) f32
    for i in range(n_layers):                            # static unrolled loop
        w_ref = refs[1 + 2 * i]                          # (in_p_i, out_p_i) bf16
        b_ref = refs[2 + 2 * i]                          # (1, out_p_i)      f32
        y = jnp.dot(h.astype(jnp.bfloat16), w_ref[...],
                    preferred_element_type=jnp.float32) + b_ref[...]
        if i < n_layers - 1:
            y = jnp.maximum(y, 0.0)                      # ReLU on hidden layers
        h = y
    o_ref[...] = h.astype(o_ref.dtype)


# ---------------------------------------------------------------------------
# Parameter init mirroring StochasticLinear.reset_parameters()
# (weights kept in torch layout (out_features, in_features)).
# ---------------------------------------------------------------------------
def init_bnn_params(key, input_size, hidden_sizes, output_size, prec_init=1.0):
    sigma_init = 1.0 / math.sqrt(prec_init)
    rho_val = math.log(math.exp(sigma_init) - 1.0)       # softplus^-1(sigma)
    out_sz = output_size if output_size else 1
    sizes = [input_size] + list(hidden_sizes) + [out_sz]
    params = []
    for in_f, out_f in zip(sizes[:-1], sizes[1:]):
        key, kw, kb = jax.random.split(key, 3)
        stdv = 1.0 / math.sqrt(in_f)
        params.append(dict(
            w_mu=jax.random.uniform(kw, (out_f, in_f), jnp.float32, -stdv, stdv),
            w_rho=jnp.full((out_f, in_f), rho_val, jnp.float32),
            b_mu=jax.random.uniform(kb, (1, out_f), jnp.float32, -stdv, stdv),
            b_rho=jnp.full((1, out_f), rho_val, jnp.float32),
        ))
    return params


# ---------------------------------------------------------------------------
# Forward: flatten -> hidden layers (ReLU) -> output layer (no activation).
# ---------------------------------------------------------------------------
def bnn_forward(x, params, input_size, noise_key, squeeze_output=False,
                batch_tile=512):
    n_layers = len(params)
    out_f = params[-1]["w_mu"].shape[0]

    x2 = x.reshape(-1, input_size).astype(jnp.float32)
    B = x2.shape[0]

    # Per-layer padded widths (each dim rounded to the 128-lane width).
    in_fs = [input_size] + [p["w_mu"].shape[0] for p in params[:-1]]
    out_fs = [p["w_mu"].shape[0] for p in params]
    in_ps = [_round_up(d, LANE) for d in in_fs]
    out_ps = [_round_up(d, LANE) for d in out_fs]

    # --- prologue: host eps draw + one-shot perturbation per layer ----------
    keys = jax.random.split(noise_key, 2 * n_layers)
    ws, bs = [], []
    for i, p in enumerate(params):
        o_f, i_f = p["w_mu"].shape
        ip, op = in_ps[i], out_ps[i]
        eps_w = jax.random.normal(keys[2 * i], (o_f, i_f), jnp.float32)
        eps_b = jax.random.normal(keys[2 * i + 1], (1, o_f), jnp.float32)
        # Pre-transpose to (in, out) so the kernel computes x @ W directly.
        # eps / mu padded with 0 -> padded W entries are exactly 0.
        pad_w = lambda a: jnp.pad(a, ((0, ip - i_f), (0, op - o_f)))
        pad_b = lambda a: jnp.pad(a, ((0, 0), (0, op - o_f)))
        w_bf16, b_f32 = _perturb_layer(
            pad_w(p["w_mu"].T), pad_w(p["w_rho"].T), pad_w(eps_w.T),
            pad_b(p["b_mu"]), pad_b(p["b_rho"]), pad_b(eps_b))
        ws.append(w_bf16)
        bs.append(b_f32)

    # --- batch tiling --------------------------------------------------------
    in_p0, out_pl_ = in_ps[0], out_ps[-1]
    b8 = _round_up(max(B, 1), SUBLANE)
    if b8 >= 2 * SUBLANE:
        # At least 2 grid steps so the "parallel" axis engages both v7x cores.
        tb = min(batch_tile, _round_up(_cdiv(b8, 2), SUBLANE))
    else:
        tb = b8
    bp = _round_up(b8, tb)
    x_p = jnp.pad(x2, ((0, bp - B), (0, in_p0 - input_size)))

    grid = (bp // tb,)
    in_specs = [pl.BlockSpec((tb, in_p0), lambda i: (i, 0))]
    for ip, op in zip(in_ps, out_ps):
        in_specs.append(pl.BlockSpec((ip, op), lambda i: (0, 0)))   # W_i (const)
        in_specs.append(pl.BlockSpec((1, op), lambda i: (0, 0)))    # b_i (const)
    out_spec = pl.BlockSpec((tb, out_pl_), lambda i: (i, 0))

    # VMEM budget: weights/biases + double-buffered x/o tiles, 1.5x slack,
    # clamped to [32 MiB, 64 MiB] so it fits every generation (v7x = 64 MiB).
    w_bytes = sum(ip * op * 2 + op * 4 for ip, op in zip(in_ps, out_ps))
    io_bytes = tb * in_p0 * 4 + tb * out_pl_ * 4
    need = 2 * (w_bytes + io_bytes)
    vmem_limit = int(min(max(3 * need // 2, 32 << 20), 64 << 20))

    operands = [x_p]
    for w, b in zip(ws, bs):
        operands += [w, b]

    out = pl.pallas_call(
        functools.partial(_bnn_mlp_kernel, n_layers=n_layers),
        grid=grid,
        in_specs=in_specs,
        out_specs=out_spec,
        out_shape=jax.ShapeDtypeStruct((bp, out_pl_), jnp.float32),
        compiler_params=pltpu.CompilerParams(
            dimension_semantics=("parallel",),
            vmem_limit_bytes=vmem_limit),
    )(*operands)

    z = out[:B, :out_f]
    if squeeze_output:
        z = z.reshape(-1)
    return z


if __name__ == "__main__":
    key = jax.random.PRNGKey(0)
    k_init, k_data, k_noise = jax.random.split(key, 3)

    input_size = 16
    hidden_sizes = [32, 32]
    output_size = 8

    # mimics x.view(-1, input_size): (2, 4, 16, 16) -> (128, 16)
    x = jax.random.normal(k_data, (2, 4, 16, 16), jnp.float32)
    params = init_bnn_params(k_init, input_size, hidden_sizes, output_size)

    fwd = jax.jit(functools.partial(
        bnn_forward, input_size=input_size, squeeze_output=False))

    z = jax.block_until_ready(fwd(x, params, noise_key=k_noise))

    assert z.shape == (2 * 4 * 16 * 16 // input_size, output_size)
    assert bool(jnp.all(jnp.isfinite(z)))
    assert float(jnp.max(jnp.abs(z))) > 0.0

    # Pure-JAX reference with the SAME eps draws (same key-splitting scheme).
    def ref_forward(xr, ps, nk):
        ks = jax.random.split(nk, 2 * len(ps))
        h = xr.reshape(-1, input_size).astype(jnp.float32)
        for i, p in enumerate(ps):
            o_f, i_f = p["w_mu"].shape
            eps_w = jax.random.normal(ks[2 * i], (o_f, i_f), jnp.float32)
            eps_b = jax.random.normal(ks[2 * i + 1], (1, o_f), jnp.float32)
            W = p["w_mu"] + jax.nn.softplus(p["w_rho"]) * eps_w
            b = p["b_mu"] + jax.nn.softplus(p["b_rho"]) * eps_b
            h = h @ W.T + b
            if i < len(ps) - 1:
                h = jnp.maximum(h, 0.0)
        return h

    z_ref = ref_forward(x, params, k_noise)
    err = float(jnp.max(jnp.abs(z - z_ref)))
    scale = float(jnp.max(jnp.abs(z_ref))) + 1.0
    assert err / scale < 0.05, f"mismatch vs reference: {err} (scale {scale})"

    # Same seed -> same eps -> deterministic forward pass.
    z2 = jax.block_until_ready(fwd(x, params, noise_key=k_noise))
    assert bool(jnp.allclose(z, z2))

    print("KERNEL_OK")
</pallas_src>

<mosaic_0001>
module attributes {stable_mosaic.version = 11 : i64} {
  func.func @_perturb_kernel(%arg0: i32, %arg1: memref<128x128xf32, #tpu.memory_space<vmem>>, %arg2: memref<128x128xf32, #tpu.memory_space<vmem>>, %arg3: memref<128x128xf32, #tpu.memory_space<vmem>>, %arg4: memref<1x128xf32, #tpu.memory_space<vmem>>, %arg5: memref<1x128xf32, #tpu.memory_space<vmem>>, %arg6: memref<1x128xf32, #tpu.memory_space<vmem>>, %arg7: memref<128x128xbf16, #tpu.memory_space<vmem>>, %arg8: memref<1x128xf32, #tpu.memory_space<vmem>>) attributes {dimension_semantics = [#tpu.dimension_semantics<arbitrary>], iteration_bounds = array<i64: 1>, scalar_prefetch = 0 : i64, scratch_operands = 0 : i64, tpu.core_type = #tpu.core_type<tc>, window_params = [{transform_indices = @transform_0, window_bounds = array<i64: 128, 128>}, {transform_indices = @transform_1, window_bounds = array<i64: 128, 128>}, {transform_indices = @transform_2, window_bounds = array<i64: 128, 128>}, {pipeline_mode = #tpu.pipeline_mode<synchronous>, transform_indices = @transform_3, window_bounds = array<i64: 1, 128>}, {pipeline_mode = #tpu.pipeline_mode<synchronous>, transform_indices = @transform_4, window_bounds = array<i64: 1, 128>}, {pipeline_mode = #tpu.pipeline_mode<synchronous>, transform_indices = @transform_5, window_bounds = array<i64: 1, 128>}, {transform_indices = @transform_6, window_bounds = array<i64: 128, 128>}, {pipeline_mode = #tpu.pipeline_mode<synchronous>, transform_indices = @transform_7, window_bounds = array<i64: 1, 128>}]} {
    %c0 = arith.constant 0 : index
    %c0_0 = arith.constant 0 : index
    %0 = vector.load %arg1[%c0, %c0_0] : memref<128x128xf32, #tpu.memory_space<vmem>>, vector<128x128xf32>
    %c0_1 = arith.constant 0 : index
    %c0_2 = arith.constant 0 : index
    %1 = vector.load %arg2[%c0_1, %c0_2] : memref<128x128xf32, #tpu.memory_space<vmem>>, vector<128x128xf32>
    %cst = arith.constant 0.000000e+00 : f32
    %2 = vector.broadcast %cst : f32 to vector<128x128xf32>
    %3 = arith.maximumf %1, %2 : vector<128x128xf32>
    %4 = math.absf %1 : vector<128x128xf32>
    %cst_3 = arith.constant 0.000000e+00 : f32
    %5 = vector.broadcast %cst_3 : f32 to vector<128x128xf32>
    %6 = arith.subf %5, %4 : vector<128x128xf32>
    %7 = math.exp %6 : vector<128x128xf32>
    %8 = math.log1p %7 : vector<128x128xf32>
    %9 = arith.addf %3, %8 : vector<128x128xf32>
    %c0_4 = arith.constant 0 : index
    %c0_5 = arith.constant 0 : index
    %10 = vector.load %arg3[%c0_4, %c0_5] : memref<128x128xf32, #tpu.memory_space<vmem>>, vector<128x128xf32>
    %11 = arith.mulf %9, %10 : vector<128x128xf32>
    %12 = arith.addf %0, %11 : vector<128x128xf32>
    %13 = arith.truncf %12 : vector<128x128xf32> to vector<128x128xbf16>
    %c0_6 = arith.constant 0 : index
    %c0_7 = arith.constant 0 : index
    %14 = vector.load %arg7[%c0_6, %c0_7] : memref<128x128xbf16, #tpu.memory_space<vmem>>, vector<128x128xbf16>
    tpu.vector_store %arg7[%c0_6, %c0_7], %13 {strides = array<i32>} : memref<128x128xbf16, #tpu.memory_space<vmem>>, vector<128x128xbf16>,
    %c0_i32 = arith.constant 0 : i32
    %15 = arith.cmpi eq, %arg0, %c0_i32 : i32
    %16 = arith.extui %15 : i1 to i32
    %c0_i32_8 = arith.constant 0 : i32
    %17 = arith.cmpi ne, %16, %c0_i32_8 : i32
    scf.if %17 {
      %c0_9 = arith.constant 0 : index
      %c0_10 = arith.constant 0 : index
      %18 = vector.load %arg4[%c0_9, %c0_10] : memref<1x128xf32, #tpu.memory_space<vmem>>, vector<1x128xf32>
      %c0_11 = arith.constant 0 : index
      %c0_12 = arith.constant 0 : index
      %19 = vector.load %arg5[%c0_11, %c0_12] : memref<1x128xf32, #tpu.memory_space<vmem>>, vector<1x128xf32>
      %cst_13 = arith.constant 0.000000e+00 : f32
      %20 = vector.broadcast %cst_13 : f32 to vector<1x128xf32>
      %21 = arith.maximumf %19, %20 : vector<1x128xf32>
      %22 = math.absf %19 : vector<1x128xf32>
      %cst_14 = arith.constant 0.000000e+00 : f32
      %23 = vector.broadcast %cst_14 : f32 to vector<1x128xf32>
      %24 = arith.subf %23, %22 : vector<1x128xf32>
      %25 = math.exp %24 : vector<1x128xf32>
      %26 = math.log1p %25 : vector<1x128xf32>
      %27 = arith.addf %21, %26 : vector<1x128xf32>
      %c0_15 = arith.constant 0 : index
      %c0_16 = arith.constant 0 : index
      %28 = vector.load %arg6[%c0_15, %c0_16] : memref<1x128xf32, #tpu.memory_space<vmem>>, vector<1x128xf32>
      %29 = arith.mulf %27, %28 : vector<1x128xf32>
      %30 = arith.addf %18, %29 : vector<1x128xf32>
      %c0_17 = arith.constant 0 : index
      %c0_18 = arith.constant 0 : index
      %31 = vector.load %arg8[%c0_17, %c0_18] : memref<1x128xf32, #tpu.memory_space<vmem>>, vector<1x128xf32>
      tpu.vector_store %arg8[%c0_17, %c0_18], %30 {strides = array<i32>} : memref<1x128xf32, #tpu.memory_space<vmem>>, vector<1x128xf32>,
    } else {
    }
    return
  }
  func.func @transform_0(%arg0: i32) -> (i32, i32) {
    %c0_i32 = arith.constant 0 : i32
    %c0_i32_0 = arith.constant 0 : i32
    return %arg0, %c0_i32 : i32, i32
  }
  func.func @transform_1(%arg0: i32) -> (i32, i32) {
    %c0_i32 = arith.constant 0 : i32
    %c0_i32_0 = arith.constant 0 : i32
    return %arg0, %c0_i32 : i32, i32
  }
  func.func @transform_2(%arg0: i32) -> (i32, i32) {
    %c0_i32 = arith.constant 0 : i32
    %c0_i32_0 = arith.constant 0 : i32
    return %arg0, %c0_i32 : i32, i32
  }
  func.func @transform_3(%arg0: i32) -> (i32, i32) {
    %c0_i32 = arith.constant 0 : i32
    %c0_i32_0 = arith.constant 0 : i32
    %c0_i32_1 = arith.constant 0 : i32
    return %c0_i32, %c0_i32_0 : i32, i32
  }
  func.func @transform_4(%arg0: i32) -> (i32, i32) {
    %c0_i32 = arith.constant 0 : i32
    %c0_i32_0 = arith.constant 0 : i32
    %c0_i32_1 = arith.constant 0 : i32
    return %c0_i32, %c0_i32_0 : i32, i32
  }
  func.func @transform_5(%arg0: i32) -> (i32, i32) {
    %c0_i32 = arith.constant 0 : i32
    %c0_i32_0 = arith.constant 0 : i32
    %c0_i32_1 = arith.constant 0 : i32
    return %c0_i32, %c0_i32_0 : i32, i32
  }
  func.func @transform_6(%arg0: i32) -> (i32, i32) {
    %c0_i32 = arith.constant 0 : i32
    %c0_i32_0 = arith.constant 0 : i32
    return %arg0, %c0_i32 : i32, i32
  }
  func.func @transform_7(%arg0: i32) -> (i32, i32) {
    %c0_i32 = arith.constant 0 : i32
    %c0_i32_0 = arith.constant 0 : i32
    %c0_i32_1 = arith.constant 0 : i32
    return %c0_i32, %c0_i32_0 : i32, i32
  }
}

module attributes {stable_mosaic.version = 11 : i64} {
  func.func @_bnn_mlp_kernel(%arg0: i32, %arg1: memref<64x128xf32, #tpu.memory_space<vmem>>, %arg2: memref<128x128xbf16, #tpu.memory_space<vmem>>, %arg3: memref<1x128xf32, #tpu.memory_space<vmem>>, %arg4: memref<128x128xbf16, #tpu.memory_space<vmem>>, %arg5: memref<1x128xf32, #tpu.memory_space<vmem>>, %arg6: memref<128x128xbf16, #tpu.memory_space<vmem>>, %arg7: memref<1x128xf32, #tpu.memory_space<vmem>>, %arg8: memref<64x128xf32, #tpu.memory_space<vmem>>) attributes {dimension_semantics = [#tpu.dimension_semantics<parallel>], iteration_bounds = array<i64: 2>, scalar_prefetch = 0 : i64, scratch_operands = 0 : i64, tpu.core_type = #tpu.core_type<tc>, window_params = [{transform_indices = @transform_0, window_bounds = array<i64: 64, 128>}, {pipeline_mode = #tpu.pipeline_mode<synchronous>, transform_indices = @transform_1, window_bounds = array<i64: 128, 128>}, {pipeline_mode = #tpu.pipeline_mode<synchronous>, transform_indices = @transform_2, window_bounds = array<i64: 1, 128>}, {pipeline_mode = #tpu.pipeline_mode<synchronous>, transform_indices = @transform_3, window_bounds = array<i64: 128, 128>}, {pipeline_mode = #tpu.pipeline_mode<synchronous>, transform_indices = @transform_4, window_bounds = array<i64: 1, 128>}, {pipeline_mode = #tpu.pipeline_mode<synchronous>, transform_indices = @transform_5, window_bounds = array<i64: 128, 128>}, {pipeline_mode = #tpu.pipeline_mode<synchronous>, transform_indices = @transform_6, window_bounds = array<i64: 1, 128>}, {transform_indices = @transform_7, window_bounds = array<i64: 64, 128>}]} {
    %c0 = arith.constant 0 : index
    %c0_0 = arith.constant 0 : index
    %0 = vector.load %arg1[%c0, %c0_0] : memref<64x128xf32, #tpu.memory_space<vmem>>, vector<64x128xf32>
    %1 = arith.truncf %0 : vector<64x128xf32> to vector<64x128xbf16>
    %c0_1 = arith.constant 0 : index
    %c0_2 = arith.constant 0 : index
    %2 = vector.load %arg2[%c0_1, %c0_2] : memref<128x128xbf16, #tpu.memory_space<vmem>>, vector<128x128xbf16>
    %cst = arith.constant dense<0.000000e+00> : vector<64x128xf32>
    %3 = tpu.matmul %1, %2, %cst {dimension_numbers = #tpu.dot_dimension_numbers<[1], [0], [0], [1], [0, 0, 1, 1], [], []>} : vector<64x128xbf16>, vector<128x128xbf16>, vector<64x128xf32> -> vector<64x128xf32>
    %c0_3 = arith.constant 0 : index
    %c0_4 = arith.constant 0 : index
    %4 = vector.load %arg3[%c0_3, %c0_4] : memref<1x128xf32, #tpu.memory_space<vmem>>, vector<1x128xf32>
    %5 = vector.broadcast %4 : vector<1x128xf32> to vector<64x128xf32>
    %6 = arith.addf %3, %5 : vector<64x128xf32>
    %cst_5 = arith.constant 0.000000e+00 : f32
    %7 = vector.broadcast %cst_5 : f32 to vector<64x128xf32>
    %8 = arith.maximumf %6, %7 : vector<64x128xf32>
    %9 = arith.truncf %8 : vector<64x128xf32> to vector<64x128xbf16>
    %c0_6 = arith.constant 0 : index
    %c0_7 = arith.constant 0 : index
    %10 = vector.load %arg4[%c0_6, %c0_7] : memref<128x128xbf16, #tpu.memory_space<vmem>>, vector<128x128xbf16>
    %cst_8 = arith.constant dense<0.000000e+00> : vector<64x128xf32>
    %11 = tpu.matmul %9, %10, %cst_8 {dimension_numbers = #tpu.dot_dimension_numbers<[1], [0], [0], [1], [0, 0, 1, 1], [], []>} : vector<64x128xbf16>, vector<128x128xbf16>, vector<64x128xf32> -> vector<64x128xf32>
    %c0_9 = arith.constant 0 : index
    %c0_10 = arith.constant 0 : index
    %12 = vector.load %arg5[%c0_9, %c0_10] : memref<1x128xf32, #tpu.memory_space<vmem>>, vector<1x128xf32>
    %13 = vector.broadcast %12 : vector<1x128xf32> to vector<64x128xf32>
    %14 = arith.addf %11, %13 : vector<64x128xf32>
    %cst_11 = arith.constant 0.000000e+00 : f32
    %15 = vector.broadcast %cst_11 : f32 to vector<64x128xf32>
    %16 = arith.maximumf %14, %15 : vector<64x128xf32>
    %17 = arith.truncf %16 : vector<64x128xf32> to vector<64x128xbf16>
    %c0_12 = arith.constant 0 : index
    %c0_13 = arith.constant 0 : index
    %18 = vector.load %arg6[%c0_12, %c0_13] : memref<128x128xbf16, #tpu.memory_space<vmem>>, vector<128x128xbf16>
    %cst_14 = arith.constant dense<0.000000e+00> : vector<64x128xf32>
    %19 = tpu.matmul %17, %18, %cst_14 {dimension_numbers = #tpu.dot_dimension_numbers<[1], [0], [0], [1], [0, 0, 1, 1], [], []>} : vector<64x128xbf16>, vector<128x128xbf16>, vector<64x128xf32> -> vector<64x128xf32>
    %c0_15 = arith.constant 0 : index
    %c0_16 = arith.constant 0 : index
    %20 = vector.load %arg7[%c0_15, %c0_16] : memref<1x128xf32, #tpu.memory_space<vmem>>, vector<1x128xf32>
    %21 = vector.broadcast %20 : vector<1x128xf32> to vector<64x128xf32>
    %22 = arith.addf %19, %21 : vector<64x128xf32>
    %c0_17 = arith.constant 0 : index
    %c0_18 = arith.constant 0 : index
    %23 = vector.load %arg8[%c0_17, %c0_18] : memref<64x128xf32, #tpu.memory_space<vmem>>, vector<64x128xf32>
    tpu.vector_store %arg8[%c0_17, %c0_18], %22 {strides = array<i32>} : memref<64x128xf32, #tpu.memory_space<vmem>>, vector<64x128xf32>,
    return
  }
  func.func @transform_0(%arg0: i32) -> (i32, i32) {
    %c0_i32 = arith.constant 0 : i32
    %c0_i32_0 = arith.constant 0 : i32
    return %arg0, %c0_i32 : i32, i32
  }
  func.func @transform_1(%arg0: i32) -> (i32, i32) {
    %c0_i32 = arith.constant 0 : i32
    %c0_i32_0 = arith.constant 0 : i32
    %c0_i32_1 = arith.constant 0 : i32
    return %c0_i32, %c0_i32_0 : i32, i32
  }
  func.func @transform_2(%arg0: i32) -> (i32, i32) {
    %c0_i32 = arith.constant 0 : i32
    %c0_i32_0 = arith.constant 0 : i32
    %c0_i32_1 = arith.constant 0 : i32
    return %c0_i32, %c0_i32_0 : i32, i32
  }
  func.func @transform_3(%arg0: i32) -> (i32, i32) {
    %c0_i32 = arith.constant 0 : i32
    %c0_i32_0 = arith.constant 0 : i32
    %c0_i32_1 = arith.constant 0 : i32
    return %c0_i32, %c0_i32_0 : i32, i32
  }
  func.func @transform_4(%arg0: i32) -> (i32, i32) {
    %c0_i32 = arith.constant 0 : i32
    %c0_i32_0 = arith.constant 0 : i32
    %c0_i32_1 = arith.constant 0 : i32
    return %c0_i32, %c0_i32_0 : i32, i32
  }
  func.func @transform_5(%arg0: i32) -> (i32, i32) {
    %c0_i32 = arith.constant 0 : i32
    %c0_i32_0 = arith.constant 0 : i32
    %c0_i32_1 = arith.constant 0 : i32
    return %c0_i32, %c0_i32_0 : i32, i32
  }
  func.func @transform_6(%arg0: i32) -> (i32, i32) {
    %c0_i32 = arith.constant 0 : i32
    %c0_i32_0 = arith.constant 0 : i32
    %c0_i32_1 = arith.constant 0 : i32
    return %c0_i32, %c0_i32_0 : i32, i32
  }
  func.func @transform_7(%arg0: i32) -> (i32, i32) {
    %c0_i32 = arith.constant 0 : i32
    %c0_i32_0 = arith.constant 0 : i32
    return %arg0, %c0_i32 : i32, i32
  }
}

</mosaic_0001>

<llo_original>
// kernel: bnn_forward.7
$region0: #{bnn_forward.7}
  #allocation0 [shape = 'u32[]', space=smem, size = 0x4, offset = 0x4, fixed_abs, tag = 'smem constant byte address 0x4 - core index']
  #allocation1 [shape = 'u32[72,128]{1,0:T(1,128)}', space=vmem, size = 0x9000, scoped, tag = 'internal scratch']
  %s0 = inlined_call_operand.vmem [shape: f32[128,128], index: 0, kind: input, shape index: {}]
  %s1 = inlined_call_operand.vmem [shape: f32[128,128], index: 1, kind: input, shape index: {}]
  %s2 = inlined_call_operand.vmem [shape: f32[128,128], index: 2, kind: input, shape index: {}]
  %s3 = inlined_call_operand.vmem [shape: f32[1,128], index: 3, kind: input, shape index: {}]
  %s4 = inlined_call_operand.vmem [shape: f32[1,128], index: 4, kind: input, shape index: {}]
  %s5 = inlined_call_operand.vmem [shape: f32[1,128], index: 5, kind: input, shape index: {}]
  %s6 = inlined_call_operand.vmem [shape: bf16[128,128], index: 6, kind: output, shape index: {0}]
  %s7 = inlined_call_operand.vmem [shape: f32[1,128], index: 7, kind: output, shape index: {1}]
  %8 = xla_tuple %s6, %s7
  %s9 = sld [smem:[#allocation0]]
  $region46: #{bnn_forward.7} parent=0
    _
  %s11 = ssub.s32 1, %s9
  %s12 = scalar_select 0, %s11, %s9
  // Predicated region
  $region2: #{bnn_forward.7} parent=0 // pred_check
    _
  $region3: #{bnn_forward.7} parent=0 // pred_check_branch
    %14 = sbr.rel (0) target = $region5
  $region4: #{bnn_forward.7} parent=0 // pred_region
    _
  $region5: #{bnn_forward.7} parent=0 // pred_fallthru
    _
  // Predicated region
  $region6: #{bnn_forward.7} parent=0 // pred_check
    _
  $region7: #{bnn_forward.7} parent=0 // pred_check_branch
    %16 = sbr.rel (0) target = $region9
  $region8: #{bnn_forward.7} parent=0 // pred_region
    _
  $region9: #{bnn_forward.7} parent=0 // pred_fallthru
    _
  // Predicated region
  $region10: #{bnn_forward.7} parent=0 // pred_check
    _
  $region11: #{bnn_forward.7} parent=0 // pred_check_branch
    %18 = sbr.rel (0) target = $region13
  $region12: #{bnn_forward.7} parent=0 // pred_region
    _
  $region13: #{bnn_forward.7} parent=0 // pred_fallthru
    _
  // Predicated region
  $region14: #{bnn_forward.7} parent=0 // pred_check
    _
  $region15: #{bnn_forward.7} parent=0 // pred_check_branch
    %20 = sbr.rel (0) target = $region17
  $region16: #{bnn_forward.7} parent=0 // pred_region
    _
  $region17: #{bnn_forward.7} parent=0 // pred_fallthru
    _
  // Predicated region
  $region18: #{bnn_forward.7} parent=0 // pred_check
    _
  $region19: #{bnn_forward.7} parent=0 // pred_check_branch
    %22 = sbr.rel (0) target = $region21
  $region20: #{bnn_forward.7} parent=0 // pred_region
    _
  $region21: #{bnn_forward.7} parent=0 // pred_fallthru
    _
  // Predicated region
  $region22: #{bnn_forward.7} parent=0 // pred_check
    _
  $region23: #{bnn_forward.7} parent=0 // pred_check_branch
    %24 = sbr.rel (0) target = $region25
  $region24: #{bnn_forward.7} parent=0 // pred_region
    _
  $region25: #{bnn_forward.7} parent=0 // pred_fallthru
    _
  %v25 = vld [vmem:[%s0] sm:$0xff]
  %v26 = vld [vmem:[%s0 + $0x8] sm:$0xff]
  %v27 = vld [vmem:[%s0 + $0x10] sm:$0xff]
  %v28 = vld [vmem:[%s0 + $0x18] sm:$0xff]
  %v29 = vld [vmem:[%s0 + $0x20] sm:$0xff]
  %v30 = vld [vmem:[%s0 + $0x28] sm:$0xff]
  %v31 = vld [vmem:[%s0 + $0x30] sm:$0xff]
  %v32 = vld [vmem:[%s0 + $0x38] sm:$0xff]
  %v33 = vld [vmem:[%s0 + $0x40] sm:$0xff]
  %v34 = vld [vmem:[%s0 + $0x48] sm:$0xff]
  %v35 = vld [vmem:[%s0 + $0x50] sm:$0xff]
  %v36 = vld [vmem:[%s0 + $0x58] sm:$0xff]
  %v37 = vld [vmem:[%s0 + $0x60] sm:$0xff]
  %v38 = vld [vmem:[%s0 + $0x68] sm:$0xff]
  %v39 = vld [vmem:[%s0 + $0x70] sm:$0xff]
  %v40 = vld [vmem:[%s0 + $0x78] sm:$0xff]
  %v41 = vld [vmem:[%s1] sm:$0xff]
  %v42 = vld [vmem:[%s1 + $0x8] sm:$0xff]
  %v43 = vld [vmem:[%s1 + $0x10] sm:$0xff]
  %v44 = vld [vmem:[%s1 + $0x18] sm:$0xff]
  %v45 = vld [vmem:[%s1 + $0x20] sm:$0xff]
  %v46 = vld [vmem:[%s1 + $0x28] sm:$0xff]
  %v47 = vld [vmem:[%s1 + $0x30] sm:$0xff]
  %v48 = vld [vmem:[%s1 + $0x38] sm:$0xff]
  %v49 = vld [vmem:[%s1 + $0x40] sm:$0xff]
  %v50 = vld [vmem:[%s1 + $0x48] sm:$0xff]
  %v51 = vld [vmem:[%s1 + $0x50] sm:$0xff]
  %v52 = vld [vmem:[%s1 + $0x58] sm:$0xff]
  %v53 = vld [vmem:[%s1 + $0x60] sm:$0xff]
  %v54 = vld [vmem:[%s1 + $0x68] sm:$0xff]
  %v55 = vld [vmem:[%s1 + $0x70] sm:$0xff]
  %v56 = vld [vmem:[%s1 + $0x78] sm:$0xff]
  %v57 = vmax.f32 %v41, 0.0
  %v58 = vmax.f32 %v42, 0.0
  %v59 = vmax.f32 %v43, 0.0
  %v60 = vmax.f32 %v44, 0.0
  %v61 = vmax.f32 %v45, 0.0
  %v62 = vmax.f32 %v46, 0.0
  %v63 = vmax.f32 %v47, 0.0
  %v64 = vmax.f32 %v48, 0.0
  %v65 = vmax.f32 %v49, 0.0
  %v66 = vmax.f32 %v50, 0.0
  %v67 = vmax.f32 %v51, 0.0
  %v68 = vmax.f32 %v52, 0.0
  %v69 = vmax.f32 %v53, 0.0
  %v70 = vmax.f32 %v54, 0.0
  %v71 = vmax.f32 %v55, 0.0
  %v72 = vmax.f32 %v56, 0.0
  %v73 = vand.u32 2147483647, %v41
  %v74 = vand.u32 2147483647, %v42
  %v75 = vand.u32 2147483647, %v43
  %v76 = vand.u32 2147483647, %v44
  %v77 = vand.u32 2147483647, %v45
  %v78 = vand.u32 2147483647, %v46
  %v79 = vand.u32 2147483647, %v47
  %v80 = vand.u32 2147483647, %v48
  %v81 = vand.u32 2147483647, %v49
  %v82 = vand.u32 2147483647, %v50
  %v83 = vand.u32 2147483647, %v51
  %v84 = vand.u32 2147483647, %v52
  %v85 = vand.u32 2147483647, %v53
  %v86 = vand.u32 2147483647, %v54
  %v87 = vand.u32 2147483647, %v55
  %v88 = vand.u32 2147483647, %v56
  %v89 = vsub.f32 0.0, %v73
  %v90 = vsub.f32 0.0, %v74
  %v91 = vsub.f32 0.0, %v75
  %v92 = vsub.f32 0.0, %v76
  %v93 = vsub.f32 0.0, %v77
  %v94 = vsub.f32 0.0, %v78
  %v95 = vsub.f32 0.0, %v79
  %v96 = vsub.f32 0.0, %v80
  %v97 = vsub.f32 0.0, %v81
  %v98 = vsub.f32 0.0, %v82
  %v99 = vsub.f32 0.0, %v83
  %v100 = vsub.f32 0.0, %v84
  %v101 = vsub.f32 0.0, %v85
  %v102 = vsub.f32 0.0, %v86
  %v103 = vsub.f32 0.0, %v87
  %v104 = vsub.f32 0.0, %v88
  %v105 = vmul.f32 %v89, 1.442695
  %v106 = vpow.pop %v105
  %v107 = vmul.f32 %v90, 1.442695
  %v108 = vpow.pop %v107
  %v109 = vmul.f32 %v91, 1.442695
  %v110 = vpow.pop %v109
  %v111 = vmul.f32 %v92, 1.442695
  %v112 = vpow.pop %v111
  %v113 = vmul.f32 %v93, 1.442695
  %v114 = vpow.pop %v113
  %v115 = vmul.f32 %v94, 1.442695
  %v116 = vpow.pop %v115
  %v117 = vmul.f32 %v95, 1.442695
  %v118 = vpow.pop %v117
  %v119 = vmul.f32 %v96, 1.442695
  %v120 = vpow.pop %v119
  %v121 = vmul.f32 %v97, 1.442695
  %v122 = vpow.pop %v121
  %v123 = vmul.f32 %v98, 1.442695
  %v124 = vpow.pop %v123
  %v125 = vmul.f32 %v99, 1.442695
  %v126 = vpow.pop %v125
  %v127 = vmul.f32 %v100, 1.442695
  %v128 = vpow.pop %v127
  %v129 = vmul.f32 %v101, 1.442695
  %v130 = vpow.pop %v129
  %v131 = vmul.f32 %v102, 1.442695
  %v132 = vpow.pop %v131
  %v133 = vmul.f32 %v103, 1.442695
  %v134 = vpow.pop %v133
  %v135 = vmul.f32 %v104, 1.442695
  %v136 = vpow.pop %v135
  %v137 = vadd.f32 %v106, 1.0
  %v138 = vlog2.pop %v137
  %v139 = vmul.f32 %v138, 0.6931472
  %v140 = vmul.f32 -0.5, %v106
  %v141 = vadd.f32 %v140, 1.0
  %v142 = vmul.f32 %v141, %v106
  %v143 = vand.u32 2147483647, %v106
  %vm144 = vcmp.lt.f32.partialorder %v143, 0.0004427343
  %v145 = vsel %vm144, %v142, %v139
  %v146 = vadd.f32 %v108, 1.0
  %v147 = vlog2.pop %v146
  %v148 = vmul.f32 %v147, 0.6931472
  %v149 = vmul.f32 -0.5, %v108
  %v150 = vadd.f32 %v149, 1.0
  %v151 = vmul.f32 %v150, %v108
  %v152 = vand.u32 2147483647, %v108
  %vm153 = vcmp.lt.f32.partialorder %v152, 0.0004427343
  %v154 = vsel %vm153, %v151, %v148
  %v155 = vadd.f32 %v110, 1.0
  %v156 = vlog2.pop %v155
  %v157 = vmul.f32 %v156, 0.6931472
  %v158 = vmul.f32 -0.5, %v110
  %v159 = vadd.f32 %v158, 1.0
  %v160 = vmul.f32 %v159, %v110
  %v161 = vand.u32 2147483647, %v110
  %vm162 = vcmp.lt.f32.partialorder %v161, 0.0004427343
  %v163 = vsel %vm162, %v160, %v157
  %v164 = vadd.f32 %v112, 1.0
  %v165 = vlog2.pop %v164
  %v166 = vmul.f32 %v165, 0.6931472
  %v167 = vmul.f32 -0.5, %v112
  %v168 = vadd.f32 %v167, 1.0
  %v169 = vmul.f32 %v168, %v112
  %v170 = vand.u32 2147483647, %v112
  %vm171 = vcmp.lt.f32.partialorder %v170, 0.0004427343
  %v172 = vsel %vm171, %v169, %v166
  %v173 = vadd.f32 %v114, 1.0
  %v174 = vlog2.pop %v173
  %v175 = vmul.f32 %v174, 0.6931472
  %v176 = vmul.f32 -0.5, %v114
  %v177 = vadd.f32 %v176, 1.0
  %v178 = vmul.f32 %v177, %v114
  %v179 = vand.u32 2147483647, %v114
  %vm180 = vcmp.lt.f32.partialorder %v179, 0.0004427343
  %v181 = vsel %vm180, %v178, %v175
  %v182 = vadd.f32 %v116, 1.0
  %v183 = vlog2.pop %v182
  %v184 = vmul.f32 %v183, 0.6931472
  %v185 = vmul.f32 -0.5, %v116
  %v186 = vadd.f32 %v185, 1.0
  %v187 = vmul.f32 %v186, %v116
  %v188 = vand.u32 2147483647, %v116
  %vm189 = vcmp.lt.f32.partialorder %v188, 0.0004427343
  %v190 = vsel %vm189, %v187, %v184
  %v191 = vadd.f32 %v118, 1.0
  %v192 = vlog2.pop %v191
  %v193 = vmul.f32 %v192, 0.6931472
  %v194 = vmul.f32 -0.5, %v118
  %v195 = vadd.f32 %v194, 1.0
  %v196 = vmul.f32 %v195, %v118
  %v197 = vand.u32 2147483647, %v118
  %vm198 = vcmp.lt.f32.partialorder %v197, 0.0004427343
  %v199 = vsel %vm198, %v196, %v193
  %v200 = vadd.f32 %v120, 1.0
  %v201 = vlog2.pop %v200
  %v202 = vmul.f32 %v201, 0.6931472
  %v203 = vmul.f32 -0.5, %v120
  %v204 = vadd.f32 %v203, 1.0
  %v205 = vmul.f32 %v204, %v120
  %v206 = vand.u32 2147483647, %v120
  %vm207 = vcmp.lt.f32.partialorder %v206, 0.0004427343
  %v208 = vsel %vm207, %v205, %v202
  %v209 = vadd.f32 %v122, 1.0
  %v210 = vlog2.pop %v209
  %v211 = vmul.f32 %v210, 0.6931472
  %v212 = vmul.f32 -0.5, %v122
  %v213 = vadd.f32 %v212, 1.0
  %v214 = vmul.f32 %v213, %v122
  %v215 = vand.u32 2147483647, %v122
  %vm216 = vcmp.lt.f32.partialorder %v215, 0.0004427343
  %v217 = vsel %vm216, %v214, %v211
  %v218 = vadd.f32 %v124, 1.0
  %v219 = vlog2.pop %v218
  %v220 = vmul.f32 %v219, 0.6931472
  %v221 = vmul.f32 -0.5, %v124
  %v222 = vadd.f32 %v221, 1.0
  %v223 = vmul.f32 %v222, %v124
  %v224 = vand.u32 2147483647, %v124
  %vm225 = vcmp.lt.f32.partialorder %v224, 0.0004427343
  %v226 = vsel %vm225, %v223, %v220
  %v227 = vadd.f32 %v126, 1.0
  %v228 = vlog2.pop %v227
  %v229 = vmul.f32 %v228, 0.6931472
  %v230 = vmul.f32 -0.5, %v126
  %v231 = vadd.f32 %v230, 1.0
  %v232 = vmul.f32 %v231, %v126
  %v233 = vand.u32 2147483647, %v126
  %vm234 = vcmp.lt.f32.partialorder %v233, 0.0004427343
  %v235 = vsel %vm234, %v232, %v229
  %v236 = vadd.f32 %v128, 1.0
  %v237 = vlog2.pop %v236
  %v238 = vmul.f32 %v237, 0.6931472
  %v239 = vmul.f32 -0.5, %v128
  %v240 = vadd.f32 %v239, 1.0
  %v241 = vmul.f32 %v240, %v128
  %v242 = vand.u32 2147483647, %v128
  %vm243 = vcmp.lt.f32.partialorder %v242, 0.0004427343
  %v244 = vsel %vm243, %v241, %v238
  %v245 = vadd.f32 %v130, 1.0
  %v246 = vlog2.pop %v245
  %v247 = vmul.f32 %v246, 0.6931472
  %v248 = vmul.f32 -0.5, %v130
  %v249 = vadd.f32 %v248, 1.0
  %v250 = vmul.f32 %v249, %v130
  %v251 = vand.u32 2147483647, %v130
  %vm252 = vcmp.lt.f32.partialorder %v251, 0.0004427343
  %v253 = vsel %vm252, %v250, %v247
  %v254 = vadd.f32 %v132, 1.0
  %v255 = vlog2.pop %v254
  %v256 = vmul.f32 %v255, 0.6931472
  %v257 = vmul.f32 -0.5, %v132
  %v258 = vadd.f32 %v257, 1.0
  %v259 = vmul.f32 %v258, %v132
  %v260 = vand.u32 2147483647, %v132
  %vm261 = vcmp.lt.f32.partialorder %v260, 0.0004427343
  %v262 = vsel %vm261, %v259, %v256
  %v263 = vadd.f32 %v134, 1.0
  %v264 = vlog2.pop %v263
  %v265 = vmul.f32 %v264, 0.6931472
  %v266 = vmul.f32 -0.5, %v134
  %v267 = vadd.f32 %v266, 1.0
  %v268 = vmul.f32 %v267, %v134
  %v269 = vand.u32 2147483647, %v134
  %vm270 = vcmp.lt.f32.partialorder %v269, 0.0004427343
  %v271 = vsel %vm270, %v268, %v265
  %v272 = vadd.f32 %v136, 1.0
  %v273 = vlog2.pop %v272
  %v274 = vmul.f32 %v273, 0.6931472
  %v275 = vmul.f32 -0.5, %v136
  %v276 = vadd.f32 %v275, 1.0
  %v277 = vmul.f32 %v276, %v136
  %v278 = vand.u32 2147483647, %v136
  %vm279 = vcmp.lt.f32.partialorder %v278, 0.0004427343
  %v280 = vsel %vm279, %v277, %v274
  %v281 = vadd.f32 %v57, %v145
  %v282 = vadd.f32 %v58, %v154
  %v283 = vadd.f32 %v59, %v163
  %v284 = vadd.f32 %v60, %v172
  %v285 = vadd.f32 %v61, %v181
  %v286 = vadd.f32 %v62, %v190
  %v287 = vadd.f32 %v63, %v199
  %v288 = vadd.f32 %v64, %v208
  %v289 = vadd.f32 %v65, %v217
  %v290 = vadd.f32 %v66, %v226
  %v291 = vadd.f32 %v67, %v235
  %v292 = vadd.f32 %v68, %v244
  %v293 = vadd.f32 %v69, %v253
  %v294 = vadd.f32 %v70, %v262
  %v295 = vadd.f32 %v71, %v271
  %v296 = vadd.f32 %v72, %v280
  %v297 = vld [vmem:[%s2] sm:$0xff]
  %v298 = vld [vmem:[%s2 + $0x8] sm:$0xff]
  %v299 = vld [vmem:[%s2 + $0x10] sm:$0xff]
  %v300 = vld [vmem:[%s2 + $0x18] sm:$0xff]
  %v301 = vld [vmem:[%s2 + $0x20] sm:$0xff]
  %v302 = vld [vmem:[%s2 + $0x28] sm:$0xff]
  %v303 = vld [vmem:[%s2 + $0x30] sm:$0xff]
  %v304 = vld [vmem:[%s2 + $0x38] sm:$0xff]
  %v305 = vld [vmem:[%s2 + $0x40] sm:$0xff]
  %v306 = vld [vmem:[%s2 + $0x48] sm:$0xff]
  %v307 = vld [vmem:[%s2 + $0x50] sm:$0xff]
  %v308 = vld [vmem:[%s2 + $0x58] sm:$0xff]
  %v309 = vld [vmem:[%s2 + $0x60] sm:$0xff]
  %v310 = vld [vmem:[%s2 + $0x68] sm:$0xff]
  %v311 = vld [vmem:[%s2 + $0x70] sm:$0xff]
  %v312 = vld [vmem:[%s2 + $0x78] sm:$0xff]
  %v313 = vmul.f32 %v281, %v297
  %v314 = vmul.f32 %v282, %v298
  %v315 = vmul.f32 %v283, %v299
  %v316 = vmul.f32 %v284, %v300
  %v317 = vmul.f32 %v285, %v301
  %v318 = vmul.f32 %v286, %v302
  %v319 = vmul.f32 %v287, %v303
  %v320 = vmul.f32 %v288, %v304
  %v321 = vmul.f32 %v289, %v305
  %v322 = vmul.f32 %v290, %v306
  %v323 = vmul.f32 %v291, %v307
  %v324 = vmul.f32 %v292, %v308
  %v325 = vmul.f32 %v293, %v309
  %v326 = vmul.f32 %v294, %v310
  %v327 = vmul.f32 %v295, %v311
  %v328 = vmul.f32 %v296, %v312
  %v329 = vadd.f32 %v25, %v313
  %v330 = vadd.f32 %v26, %v314
  %v331 = vadd.f32 %v27, %v315
  %v332 = vadd.f32 %v28, %v316
  %v333 = vadd.f32 %v29, %v317
  %v334 = vadd.f32 %v30, %v318
  %v335 = vadd.f32 %v31, %v319
  %v336 = vadd.f32 %v32, %v320
  %v337 = vadd.f32 %v33, %v321
  %v338 = vadd.f32 %v34, %v322
  %v339 = vadd.f32 %v35, %v323
  %v340 = vadd.f32 %v36, %v324
  %v341 = vadd.f32 %v37, %v325
  %v342 = vadd.f32 %v38, %v326
  %v343 = vadd.f32 %v39, %v327
  %v344 = vadd.f32 %v40, %v328
  %v345 = vpack.c.bf16 %v329, %v329
  %v346 = vpack.c.bf16 %v330, %v330
  %v347 = vpack.c.bf16 %v331, %v331
  %v348 = vpack.c.bf16 %v332, %v332
  %v349 = vpack.c.bf16 %v333, %v333
  %v350 = vpack.c.bf16 %v334, %v334
  %v351 = vpack.c.bf16 %v335, %v335
  %v352 = vpack.c.bf16 %v336, %v336
  %v353 = vpack.c.bf16 %v337, %v337
  %v354 = vpack.c.bf16 %v338, %v338
  %v355 = vpack.c.bf16 %v339, %v339
  %v356 = vpack.c.bf16 %v340, %v340
  %v357 = vpack.c.bf16 %v341, %v341
  %v358 = vpack.c.bf16 %v342, %v342
  %v359 = vpack.c.bf16 %v343, %v343
  %v360 = vpack.c.bf16 %v344, %v344
  %361 = vst [vmem:[%s6] sm:$0xf] %v345
  %362 = vst [vmem:[%s6 + $0x4] sm:$0xf] %v346
  %363 = vst [vmem:[%s6 + $0x8] sm:$0xf] %v347
  %364 = vst [vmem:[%s6 + $0xc] sm:$0xf] %v348
  %365 = vst [vmem:[%s6 + $0x10] sm:$0xf] %v349
  %366 = vst [vmem:[%s6 + $0x14] sm:$0xf] %v350
  %367 = vst [vmem:[%s6 + $0x18] sm:$0xf] %v351
  %368 = vst [vmem:[%s6 + $0x1c] sm:$0xf] %v352
  %369 = vst [vmem:[%s6 + $0x20] sm:$0xf] %v353
  %370 = vst [vmem:[%s6 + $0x24] sm:$0xf] %v354
  %371 = vst [vmem:[%s6 + $0x28] sm:$0xf] %v355
  %372 = vst [vmem:[%s6 + $0x2c] sm:$0xf] %v356
  %373 = vst [vmem:[%s6 + $0x30] sm:$0xf] %v357
  %374 = vst [vmem:[%s6 + $0x34] sm:$0xf] %v358
  %375 = vst [vmem:[%s6 + $0x38] sm:$0xf] %v359
  %376 = vst [vmem:[%s6 + $0x3c] sm:$0xf] %v360
  %p377 = scmp.eq.s32.totalorder 0, 0
  // Predicated region
  $region26: #{bnn_forward.7} parent=0 // pred_check
    %p378 = pneg %p377
  $region27: #{bnn_forward.7} parent=0 // pred_check_branch
    %380 = sbr.rel (%p378) target = $region29
  $region28: #{bnn_forward.7} parent=0 // pred_region
    %v381 = vld [vmem:[%s3] sm:$0x1]
    %v382 = vld [vmem:[%s4] sm:$0x1]
    %v383 = vmax.f32 %v382, 0.0
    %v384 = vand.u32 2147483647, %v382
    %v385 = vsub.f32 0.0, %v384
    %v386 = vmul.f32 %v385, 1.442695
    %v387 = vpow.pop %v386
    %v388 = vadd.f32 %v387, 1.0
    %v389 = vlog2.pop %v388
    %v390 = vmul.f32 %v389, 0.6931472
    %v391 = vmul.f32 -0.5, %v387
    %v392 = vadd.f32 %v391, 1.0
    %v393 = vmul.f32 %v392, %v387
    %v394 = vand.u32 2147483647, %v387
    %vm395 = vcmp.lt.f32.partialorder %v394, 0.0004427343
    %v396 = vsel %vm395, %v393, %v390
    %v397 = vadd.f32 %v383, %v396
    %v398 = vld [vmem:[%s5] sm:$0x1]
    %v399 = vmul.f32 %v397, %v398
    %v400 = vadd.f32 %v381, %v399
    %401 = vst [vmem:[%s7] sm:$0x1] %v400
  $region29: #{bnn_forward.7} parent=0 // pred_fallthru
    _
  // Predicated region
  $region30: #{bnn_forward.7} parent=0 // pred_check
    _
  $region31: #{bnn_forward.7} parent=0 // pred_check_branch
    %403 = sbr.rel (0) target = $region33
  $region32: #{bnn_forward.7} parent=0 // pred_region
    _
  $region33: #{bnn_forward.7} parent=0 // pred_fallthru
    _
  // Predicated region
  $region34: #{bnn_forward.7} parent=0 // pred_check
    _
  $region35: #{bnn_forward.7} parent=0 // pred_check_branch
    %405 = sbr.rel (0) target = $region37
  $region36: #{bnn_forward.7} parent=0 // pred_region
    _
  $region37: #{bnn_forward.7} parent=0 // pred_fallthru
    _
  // Predicated region
  $region38: #{bnn_forward.7} parent=0 // pred_check
    _
  $region39: #{bnn_forward.7} parent=0 // pred_check_branch
    %407 = sbr.rel (0) target = $region41
  $region40: #{bnn_forward.7} parent=0 // pred_region
    _
  $region41: #{bnn_forward.7} parent=0 // pred_fallthru
    _
  // Predicated region
  $region42: #{bnn_forward.7} parent=0 // pred_check
    _
  $region43: #{bnn_forward.7} parent=0 // pred_check_branch
    %409 = sbr.rel (0) target = $region45
  $region44: #{bnn_forward.7} parent=0 // pred_region
    _
  $region45: #{bnn_forward.7} parent=0 // pred_fallthru
    _

// kernel: bnn_forward.9
$region0: #{bnn_forward.9}
  #allocation0 [shape = 'u32[]', space=smem, size = 0x4, offset = 0x4, fixed_abs, tag = 'smem constant byte address 0x4 - core index']
  #allocation1 [shape = 'u32[72,128]{1,0:T(1,128)}', space=vmem, size = 0x9000, scoped, tag = 'internal scratch']
  %s0 = inlined_call_operand.vmem [shape: f32[128,128], index: 0, kind: input, shape index: {}]
  %s1 = inlined_call_operand.vmem [shape: bf16[128,128], index: 1, kind: input, shape index: {}]
  %s2 = inlined_call_operand.vmem [shape: f32[1,128], index: 2, kind: input, shape index: {}]
  %s3 = inlined_call_operand.vmem [shape: bf16[128,128], index: 3, kind: input, shape index: {}]
  %s4 = inlined_call_operand.vmem [shape: f32[1,128], index: 4, kind: input, shape index: {}]
  %s5 = inlined_call_operand.vmem [shape: bf16[128,128], index: 5, kind: input, shape index: {}]
  %s6 = inlined_call_operand.vmem [shape: f32[1,128], index: 6, kind: input, shape index: {}]
  %s7 = inlined_call_operand.vmem [shape: f32[128,128], index: 7, kind: output, shape index: {}]
  %s8 = sld [smem:[#allocation0]]
  $region61: #{bnn_forward.9} parent=0
    _
  %s10 = ssub.s32 1, %s8
  %s11 = scalar_select 0, %s10, %s8
  loop: start=0, step=1, limit=4
  $region2: #{bnn_forward.9} parent=0 // loop_pre_header
    _
  $region3: #{bnn_forward.9} parent=0 // loop_header
    %s13 = sphi 0, %s17
    %p14 = scmp.ge.s32.totalorder %s13, 4
    %s23 = sphi 0, %s25
    %s26 = sphi 0, %s23
    %s27 = sphi 0, %s26
    %s43 = sphi 0, %s27
    %s47 = sphi 0, %s47
    %s49 = sphi 0, %s47
    %s50 = sphi 0, %s49
    %s64 = sphi 0, %s50
    %s68 = sphi 0, %s68
    %s70 = sphi 0, %s68
    %s71 = sphi 0, %s70
    %s85 = sphi 0, %s71
    %s89 = sphi 0, %s89
    %s91 = sphi 0, %s89
    %s92 = sphi 0, %s91
    %s106 = sphi 0, %s92
    %s110 = sphi 0, %s110
    %s112 = sphi 0, %s110
    %s113 = sphi 0, %s112
    %s127 = sphi 0, %s113
    %s131 = sphi 0, %s131
    %s133 = sphi 0, %s131
    %s134 = sphi 0, %s133
    %s148 = sphi 0, %s134
    %s152 = sphi 0, %s152
    %s154 = sphi 0, %s152
    %s155 = sphi 0, %s154
    %s169 = sphi 0, %s155
    %s175 = sphi 0, %s177
    %s178 = sphi 0, %s175
    %s179 = sphi 0, %s178
    %s195 = sphi 0, %s179
  $region4: #{bnn_forward.9} parent=0 // loop_header_branch
    %16 = sbr.rel (%p14) target = $region8
  $region5: #{bnn_forward.9} parent=0 // loop_body
    %s18 = ssub.s32 %s13, 1
    %s19 = ssub.s32 %s13, 2
    %s20 = sadd.s32 %s13, 1
    %s21 = ssub.s32 %s13, %s20
    %p22 = scmp.eq.s32.totalorder %s21, 0
    %s24 = sadd.s32 %s23, 1
    %s25 = scalar_select %p22, %s23, %s24
    %p28 = pneg %p22
    %p29 = scmp.eq.s32.totalorder %s13, 1
    %p30 = por %p28, %p29
    %p31 = scmp.ne.s32.totalorder %s23, %s26
    %p32 = scmp.eq.s32.totalorder %s13, 0
    %p33 = por %p31, %p32
    %p34 = scmp.ne.s32.totalorder %s23, %s26
    %p35 = scmp.eq.s32.totalorder %s18, 1
    %p36 = por %p34, %p35
    %p37 = scmp.ne.s32.totalorder %s26, %s27
    %p38 = scmp.eq.s32.totalorder %s18, 0
    %p39 = por %p37, %p38
    %p40 = scmp.ne.s32.totalorder %s26, %s27
    %p41 = scmp.eq.s32.totalorder %s19, 1
    %p42 = por %p40, %p41
    %p44 = scmp.ne.s32.totalorder %s27, %s43
    %p45 = scmp.eq.s32.totalorder %s19, 0
    %p46 = por %p44, %p45
    %s48 = sadd.s32 %s47, 1
    %p51 = scmp.eq.s32.totalorder %s13, 1
    %p52 = scmp.ne.s32.totalorder %s47, %s49
    %p53 = scmp.eq.s32.totalorder %s13, 0
    %p54 = por %p52, %p53
    %p55 = scmp.ne.s32.totalorder %s47, %s49
    %p56 = scmp.eq.s32.totalorder %s18, 1
    %p57 = por %p55, %p56
    %p58 = scmp.ne.s32.totalorder %s49, %s50
    %p59 = scmp.eq.s32.totalorder %s18, 0
    %p60 = por %p58, %p59
    %p61 = scmp.ne.s32.totalorder %s49, %s50
    %p62 = scmp.eq.s32.totalorder %s19, 1
    %p63 = por %p61, %p62
    %p65 = scmp.ne.s32.totalorder %s50, %s64
    %p66 = scmp.eq.s32.totalorder %s19, 0
    %p67 = por %p65, %p66
    %s69 = sadd.s32 %s68, 1
    %p72 = scmp.eq.s32.totalorder %s13, 1
    %p73 = scmp.ne.s32.totalorder %s68, %s70
    %p74 = scmp.eq.s32.totalorder %s13, 0
    %p75 = por %p73, %p74
    %p76 = scmp.ne.s32.totalorder %s68, %s70
    %p77 = scmp.eq.s32.totalorder %s18, 1
    %p78 = por %p76, %p77
    %p79 = scmp.ne.s32.totalorder %s70, %s71
    %p80 = scmp.eq.s32.totalorder %s18, 0
    %p81 = por %p79, %p80
    %p82 = scmp.ne.s32.totalorder %s70, %s71
    %p83 = scmp.eq.s32.totalorder %s19, 1
    %p84 = por %p82, %p83
    %p86 = scmp.ne.s32.totalorder %s71, %s85
    %p87 = scmp.eq.s32.totalorder %s19, 0
    %p88 = por %p86, %p87
    %s90 = sadd.s32 %s89, 1
    %p93 = scmp.eq.s32.totalorder %s13, 1
    %p94 = scmp.ne.s32.totalorder %s89, %s91
    %p95 = scmp.eq.s32.totalorder %s13, 0
    %p96 = por %p94, %p95
    %p97 = scmp.ne.s32.totalorder %s89, %s91
    %p98 = scmp.eq.s32.totalorder %s18, 1
    %p99 = por %p97, %p98
    %p100 = scmp.ne.s32.totalorder %s91, %s92
    %p101 = scmp.eq.s32.totalorder %s18, 0
    %p102 = por %p100, %p101
    %p103 = scmp.ne.s32.totalorder %s91, %s92
    %p104 = scmp.eq.s32.totalorder %s19, 1
    %p105 = por %p103, %p104
    %p107 = scmp.ne.s32.totalorder %s92, %s106
    %p108 = scmp.eq.s32.totalorder %s19, 0
    %p109 = por %p107, %p108
    %s111 = sadd.s32 %s110, 1
    %p114 = scmp.eq.s32.totalorder %s13, 1
    %p115 = scmp.ne.s32.totalorder %s110, %s112
    %p116 = scmp.eq.s32.totalorder %s13, 0
    %p117 = por %p115, %p116
    %p118 = scmp.ne.s32.totalorder %s110, %s112
    %p119 = scmp.eq.s32.totalorder %s18, 1
    %p120 = por %p118, %p119
    %p121 = scmp.ne.s32.totalorder %s112, %s113
    %p122 = scmp.eq.s32.totalorder %s18, 0
    %p123 = por %p121, %p122
    %p124 = scmp.ne.s32.totalorder %s112, %s113
    %p125 = scmp.eq.s32.totalorder %s19, 1
    %p126 = por %p124, %p125
    %p128 = scmp.ne.s32.totalorder %s113, %s127
    %p129 = scmp.eq.s32.totalorder %s19, 0
    %p130 = por %p128, %p129
    %s132 = sadd.s32 %s131, 1
    %p135 = scmp.eq.s32.totalorder %s13, 1
    %p136 = scmp.ne.s32.totalorder %s131, %s133
    %p137 = scmp.eq.s32.totalorder %s13, 0
    %p138 = por %p136, %p137
    %p139 = scmp.ne.s32.totalorder %s131, %s133
    %p140 = scmp.eq.s32.totalorder %s18, 1
    %p141 = por %p139, %p140
    %p142 = scmp.ne.s32.totalorder %s133, %s134
    %p143 = scmp.eq.s32.totalorder %s18, 0
    %p144 = por %p142, %p143
    %p145 = scmp.ne.s32.totalorder %s133, %s134
    %p146 = scmp.eq.s32.totalorder %s19, 1
    %p147 = por %p145, %p146
    %p149 = scmp.ne.s32.totalorder %s134, %s148
    %p150 = scmp.eq.s32.totalorder %s19, 0
    %p151 = por %p149, %p150
    %s153 = sadd.s32 %s152, 1
    %p156 = scmp.eq.s32.totalorder %s13, 1
    %p157 = scmp.ne.s32.totalorder %s152, %s154
    %p158 = scmp.eq.s32.totalorder %s13, 0
    %p159 = por %p157, %p158
    %p160 = scmp.ne.s32.totalorder %s152, %s154
    %p161 = scmp.eq.s32.totalorder %s18, 1
    %p162 = por %p160, %p161
    %p163 = scmp.ne.s32.totalorder %s154, %s155
    %p164 = scmp.eq.s32.totalorder %s18, 0
    %p165 = por %p163, %p164
    %p166 = scmp.ne.s32.totalorder %s154, %s155
    %p167 = scmp.eq.s32.totalorder %s19, 1
    %p168 = por %p166, %p167
    %p170 = scmp.ne.s32.totalorder %s155, %s169
    %p171 = scmp.eq.s32.totalorder %s19, 0
    %p172 = por %p170, %p171
    %s173 = ssub.s32 %s13, %s20
    %p174 = scmp.eq.s32.totalorder %s173, 0
    %s176 = sadd.s32 %s175, 1
    %s177 = scalar_select %p174, %s175, %s176
    %p180 = pneg %p174
    %p181 = scmp.eq.s32.totalorder %s13, 1
    %p182 = por %p180, %p181
    %p183 = scmp.ne.s32.totalorder %s175, %s178
    %p184 = scmp.eq.s32.totalorder %s13, 0
    %p185 = por %p183, %p184
    %p186 = scmp.ne.s32.totalorder %s175, %s178
    %p187 = scmp.eq.s32.totalorder %s18, 1
    %p188 = por %p186, %p187
    %p189 = scmp.ne.s32.totalorder %s178, %s179
    %p190 = scmp.eq.s32.totalorder %s18, 0
    %p191 = por %p189, %p190
    %p192 = scmp.ne.s32.totalorder %s178, %s179
    %p193 = scmp.eq.s32.totalorder %s19, 1
    %p194 = por %p192, %p193
    %p196 = scmp.ne.s32.totalorder %s179, %s195
    %p197 = scmp.eq.s32.totalorder %s19, 0
    %p198 = por %p196, %p197
    %p199 = scmp.le.s32.totalorder 1, %s13
    %p200 = scmp.lt.s32.totalorder %s13, 3
    %p201 = pnand %p199, %p200
    %p202 = pneg %p201
    // Predicated region
    $region9: #{bnn_forward.9} parent=5 // pred_check
      _
    $region10: #{bnn_forward.9} parent=5 // pred_check_branch
      %204 = sbr.rel (%p201) target = $region12
    $region11: #{bnn_forward.9} parent=5 // pred_region
      %s205 = ssub.s32 %s13, 1
      // Predicated region
      $region13: #{bnn_forward.9} parent=11 // pred_check
        %p206 = pneg %p60
      $region14: #{bnn_forward.9} parent=11 // pred_check_branch
        %208 = sbr.rel (%p206) target = $region16
      $region15: #{bnn_forward.9} parent=11 // pred_region
        _
      $region16: #{bnn_forward.9} parent=11 // pred_fallthru
        _
      // Predicated region
      $region17: #{bnn_forward.9} parent=11 // pred_check
        %p209 = pneg %p81
      $region18: #{bnn_forward.9} parent=11 // pred_check_branch
        %211 = sbr.rel (%p209) target = $region20
      $region19: #{bnn_forward.9} parent=11 // pred_region
        _
      $region20: #{bnn_forward.9} parent=11 // pred_fallthru
        _
      // Predicated region
      $region21: #{bnn_forward.9} parent=11 // pred_check
        %p212 = pneg %p102
      $region22: #{bnn_forward.9} parent=11 // pred_check_branch
        %214 = sbr.rel (%p212) target = $region24
      $region23: #{bnn_forward.9} parent=11 // pred_region
        _
      $region24: #{bnn_forward.9} parent=11 // pred_fallthru
        _
      // Predicated region
      $region25: #{bnn_forward.9} parent=11 // pred_check
        %p215 = pneg %p123
      $region26: #{bnn_forward.9} parent=11 // pred_check_branch
        %217 = sbr.rel (%p215) target = $region28
      $region27: #{bnn_forward.9} parent=11 // pred_region
        _
      $region28: #{bnn_forward.9} parent=11 // pred_fallthru
        _
      // Predicated region
      $region29: #{bnn_forward.9} parent=11 // pred_check
        %p218 = pneg %p144
      $region30: #{bnn_forward.9} parent=11 // pred_check_branch
        %220 = sbr.rel (%p218) target = $region32
      $region31: #{bnn_forward.9} parent=11 // pred_region
        _
      $region32: #{bnn_forward.9} parent=11 // pred_fallthru
        _
      // Predicated region
      $region33: #{bnn_forward.9} parent=11 // pred_check
        %p221 = pneg %p165
      $region34: #{bnn_forward.9} parent=11 // pred_check_branch
        %223 = sbr.rel (%p221) target = $region36
      $region35: #{bnn_forward.9} parent=11 // pred_region
        _
      $region36: #{bnn_forward.9} parent=11 // pred_fallthru
        _
    $region12: #{bnn_forward.9} parent=5 // pred_fallthru
      _
    %p224 = scmp.lt.s32.totalorder %s13, 2
    // Predicated region
    $region37: #{bnn_forward.9} parent=5 // pred_check
      %p225 = pneg %p224
    $region38: #{bnn_forward.9} parent=5 // pred_check_branch
      %227 = sbr.rel (%p225) target = $region40
    $region39: #{bnn_forward.9} parent=5 // pred_region
      // Predicated region
      $region41: #{bnn_forward.9} parent=39 // pred_check
        %p228 = pneg %p33
      $region42: #{bnn_forward.9} parent=39 // pred_check_branch
        %230 = sbr.rel (%p228) target = $region44
      $region43: #{bnn_forward.9} parent=39 // pred_region
        %s231 = smul.u32 8, %s13
        %p232 = scmp.lt.s32.totalorder %s231, 15
        %s233 = scalar_select %p232, %s231, 15
        %s234 = smul.addr %s233, 8
        %s235 = scalar_lea.vmem %s0, %s234
        %s236 = smul.u32 8, %s13
      $region44: #{bnn_forward.9} parent=39 // pred_fallthru
        _
    $region40: #{bnn_forward.9} parent=5 // pred_fallthru
      _
    %p237 = scmp.le.s32.totalorder 1, %s13
    %p238 = scmp.lt.s32.totalorder %s13, 3
    %p239 = pnand %p237, %p238
    %p240 = pneg %p239
    // Predicated region
    $region45: #{bnn_forward.9} parent=5 // pred_check
      _
    $region46: #{bnn_forward.9} parent=5 // pred_check_branch
      %242 = sbr.rel (%p239) target = $region48
    $region47: #{bnn_forward.9} parent=5 // pred_region
      %s243 = ssub.s32 %s13, 1
      %s244 = smul.u32 8, %s18
      %p245 = scmp.lt.s32.totalorder %s244, 15
      %s246 = scalar_select %p245, %s244, 15
      %s247 = smul.addr %s246, 8
      %s248 = scalar_lea.vmem %s0, %s247
      %p249 = pneg %p39
      %p250 = pneg %p36
      %p251 = pneg %p60
      %p252 = pneg %p57
      %p253 = pneg %p81
      %p254 = pneg %p78
      %p255 = pneg %p102
      %p256 = pneg %p99
      %p257 = pneg %p123
      %p258 = pneg %p120
      %p259 = pneg %p144
      %p260 = pneg %p141
      %p261 = pneg %p165
      %p262 = pneg %p162
      %p263 = pneg %p191
      %p264 = pneg %p188
      %s265 = smul.u32 8, %s18
      %p266 = scmp.lt.s32.totalorder %s265, 15
      %s267 = scalar_select %p266, %s265, 15
      %s268 = smul.addr %s267, 8
      %s269 = scalar_lea.vmem %s7, %s268
      %s270 = smul.u32 8, %s18
      %p271 = scmp.lt.s32.totalorder %s270, 15
      %s272 = scalar_select %p271, %s270, 15
      %s273 = smul.addr %s272, 8
      %s274 = scalar_lea.vmem %s0, %s273
      %s275 = smul.u32 8, %s18
      %s276 = smul.u32 8, %s18
      %p277 = scmp.lt.s32.totalorder %s276, 15
      %s278 = scalar_select %p277, %s276, 15
      %s279 = smul.addr %s278, 8
      %s280 = scalar_lea.vmem %s7, %s279
      %s281 = smul.u32 8, %s18
      %v282 = vld [vmem:[%s274] sm:$0xff]
      %v283 = vld [vmem:[%s274 + $0x8] sm:$0xff]
      %v284 = vld [vmem:[%s274 + $0x10] sm:$0xff]
      %v285 = vld [vmem:[%s274 + $0x18] sm:$0xff]
      %v286 = vld [vmem:[%s274 + $0x20] sm:$0xff]
      %v287 = vld [vmem:[%s274 + $0x28] sm:$0xff]
      %v288 = vld [vmem:[%s274 + $0x30] sm:$0xff]
      %v289 = vld [vmem:[%s274 + $0x38] sm:$0xff]
      %v290 = vpack.c.bf16 %v283, %v282
      %v291 = vpack.c.bf16 %v285, %v284
      %v292 = vpack.c.bf16 %v287, %v286
      %v293 = vpack.c.bf16 %v289, %v288
      %v294 = vld [vmem:[%s1] sm:$0xf]
      %v295 = vld [vmem:[%s1 + $0x4] sm:$0xf]
      %v296 = vld [vmem:[%s1 + $0x8] sm:$0xf]
      %v297 = vld [vmem:[%s1 + $0xc] sm:$0xf]
      %v298 = vld [vmem:[%s1 + $0x10] sm:$0xf]
      %v299 = vld [vmem:[%s1 + $0x14] sm:$0xf]
      %v300 = vld [vmem:[%s1 + $0x18] sm:$0xf]
      %v301 = vld [vmem:[%s1 + $0x1c] sm:$0xf]
      %v302 = vld [vmem:[%s1 + $0x20] sm:$0xf]
      %v303 = vld [vmem:[%s1 + $0x24] sm:$0xf]
      %v304 = vld [vmem:[%s1 + $0x28] sm:$0xf]
      %v305 = vld [vmem:[%s1 + $0x2c] sm:$0xf]
      %v306 = vld [vmem:[%s1 + $0x30] sm:$0xf]
      %v307 = vld [vmem:[%s1 + $0x34] sm:$0xf]
      %v308 = vld [vmem:[%s1 + $0x38] sm:$0xf]
      %v309 = vld [vmem:[%s1 + $0x3c] sm:$0xf]
      %v310 = vld [vmem:[%s2] sm:$0x1]
      %v312 = vperm.slane %v310, 0
      %v330 = vunpack.c.l.b16 %v294
      %v331 = vunpack.c.l.b16 %v295
      %v332 = vunpack.c.l.b16 %v296
      %v333 = vunpack.c.l.b16 %v297
      %v334 = vunpack.c.l.b16 %v298
      %v335 = vunpack.c.l.b16 %v299
      %v336 = vunpack.c.l.b16 %v300
      %v337 = vunpack.c.l.b16 %v301
      %v338 = vunpack.c.l.b16 %v302
      %v339 = vunpack.c.l.b16 %v303
      %v340 = vunpack.c.l.b16 %v304
      %v341 = vunpack.c.l.b16 %v305
      %v342 = vunpack.c.l.b16 %v306
      %v343 = vunpack.c.l.b16 %v307
      %v344 = vunpack.c.l.b16 %v308
      %v345 = vunpack.c.l.b16 %v309
      %v346 = vpack.c.b16 %v331, %v330
      %v347 = vpack.c.b16 %v333, %v332
      %v348 = vpack.c.b16 %v335, %v334
      %v349 = vpack.c.b16 %v337, %v336
      %v350 = vpack.c.b16 %v339, %v338
      %v351 = vpack.c.b16 %v341, %v340
      %v352 = vpack.c.b16 %v343, %v342
      %v353 = vpack.c.b16 %v345, %v344
      %362 = vmatpush.bf16.msra.mxu0 %v353
      %363 = vmatpush.bf16.msra.mxu0 %v352
      %364 = vmatpush.bf16.msra.mxu0 %v351
      %365 = vmatpush.bf16.msra.mxu0 %v350
      %366 = vmatpush.bf16.msra.mxu0 %v349
      %367 = vmatpush.bf16.msra.mxu0 %v348
      %368 = vmatpush.bf16.msra.mxu0 %v347
      %369 = vmatpush.bf16.msra.mxu0 %v346
      %370 = vmatmul.bf16.gmra.mxu0 %v290
      %v371 = vpop.f32.mrf.mxu0
      %v372 = vadd.f32 %v312, %v371
      %v373 = vpop.f32.mrf.mxu0
      %v374 = vadd.f32 %v312, %v373
      %375 = vmatmul.bf16.gmra.mxu0 %v291
      %v376 = vpop.f32.mrf.mxu0
      %v377 = vadd.f32 %v312, %v376
      %v378 = vpop.f32.mrf.mxu0
      %v379 = vadd.f32 %v312, %v378
      %380 = vmatmul.bf16.gmra.mxu0 %v292
      %v381 = vpop.f32.mrf.mxu0
      %v382 = vadd.f32 %v312, %v381
      %v383 = vpop.f32.mrf.mxu0
      %v384 = vadd.f32 %v312, %v383
      %385 = vmatmul.bf16.gmra.mxu0 %v293
      %v386 = vpop.f32.mrf.mxu0
      %v387 = vadd.f32 %v312, %v386
      %v388 = vpop.f32.mrf.mxu0
      %v389 = vadd.f32 %v312, %v388
      %390 = vdwg.mxu0
      %v391 = vmax.f32 %v372, 0.0
      %v392 = vmax.f32 %v374, 0.0
      %v393 = vmax.f32 %v377, 0.0
      %v394 = vmax.f32 %v379, 0.0
      %v395 = vmax.f32 %v382, 0.0
      %v396 = vmax.f32 %v384, 0.0
      %v397 = vmax.f32 %v387, 0.0
      %v398 = vmax.f32 %v389, 0.0
      %v399 = vpack.c.bf16 %v392, %v391
      %v400 = vpack.c.bf16 %v394, %v393
      %v401 = vpack.c.bf16 %v396, %v395
      %v402 = vpack.c.bf16 %v398, %v397
      %v403 = vld [vmem:[%s3] sm:$0xf]
      %v404 = vld [vmem:[%s3 + $0x4] sm:$0xf]
      %v405 = vld [vmem:[%s3 + $0x8] sm:$0xf]
      %v406 = vld [vmem:[%s3 + $0xc] sm:$0xf]
      %v407 = vld [vmem:[%s3 + $0x10] sm:$0xf]
      %v408 = vld [vmem:[%s3 + $0x14] sm:$0xf]
      %v409 = vld [vmem:[%s3 + $0x18] sm:$0xf]
      %v410 = vld [vmem:[%s3 + $0x1c] sm:$0xf]
      %v411 = vld [vmem:[%s3 + $0x20] sm:$0xf]
      %v412 = vld [vmem:[%s3 + $0x24] sm:$0xf]
      %v413 = vld [vmem:[%s3 + $0x28] sm:$0xf]
      %v414 = vld [vmem:[%s3 + $0x2c] sm:$0xf]
      %v415 = vld [vmem:[%s3 + $0x30] sm:$0xf]
      %v416 = vld [vmem:[%s3 + $0x34] sm:$0xf]
      %v417 = vld [vmem:[%s3 + $0x38] sm:$0xf]
      %v418 = vld [vmem:[%s3 + $0x3c] sm:$0xf]
      %v419 = vld [vmem:[%s4] sm:$0x1]
      %v421 = vperm.slane %v419, 0
      %v439 = vunpack.c.l.b16 %v403
      %v440 = vunpack.c.l.b16 %v404
      %v441 = vunpack.c.l.b16 %v405
      %v442 = vunpack.c.l.b16 %v406
      %v443 = vunpack.c.l.b16 %v407
      %v444 = vunpack.c.l.b16 %v408
      %v445 = vunpack.c.l.b16 %v409
      %v446 = vunpack.c.l.b16 %v410
      %v447 = vunpack.c.l.b16 %v411
      %v448 = vunpack.c.l.b16 %v412
      %v449 = vunpack.c.l.b16 %v413
      %v450 = vunpack.c.l.b16 %v414
      %v451 = vunpack.c.l.b16 %v415
      %v452 = vunpack.c.l.b16 %v416
      %v453 = vunpack.c.l.b16 %v417
      %v454 = vunpack.c.l.b16 %v418
      %v455 = vpack.c.b16 %v440, %v439
      %v456 = vpack.c.b16 %v442, %v441
      %v457 = vpack.c.b16 %v444, %v443
      %v458 = vpack.c.b16 %v446, %v445
      %v459 = vpack.c.b16 %v448, %v447
      %v460 = vpack.c.b16 %v450, %v449
      %v461 = vpack.c.b16 %v452, %v451
      %v462 = vpack.c.b16 %v454, %v453
      %471 = vmatpush.bf16.msra.mxu0 %v462
      %472 = vmatpush.bf16.msra.mxu0 %v461
      %473 = vmatpush.bf16.msra.mxu0 %v460
      %474 = vmatpush.bf16.msra.mxu0 %v459
      %475 = vmatpush.bf16.msra.mxu0 %v458
      %476 = vmatpush.bf16.msra.mxu0 %v457
      %477 = vmatpush.bf16.msra.mxu0 %v456
      %478 = vmatpush.bf16.msra.mxu0 %v455
      %479 = vmatmul.bf16.gmra.mxu0 %v399
      %v480 = vpop.f32.mrf.mxu0
      %v481 = vadd.f32 %v421, %v480
      %v482 = vpop.f32.mrf.mxu0
      %v483 = vadd.f32 %v421, %v482
      %484 = vmatmul.bf16.gmra.mxu0 %v400
      %v485 = vpop.f32.mrf.mxu0
      %v486 = vadd.f32 %v421, %v485
      %v487 = vpop.f32.mrf.mxu0
      %v488 = vadd.f32 %v421, %v487
      %489 = vmatmul.bf16.gmra.mxu0 %v401
      %v490 = vpop.f32.mrf.mxu0
      %v491 = vadd.f32 %v421, %v490
      %v492 = vpop.f32.mrf.mxu0
      %v493 = vadd.f32 %v421, %v492
      %494 = vmatmul.bf16.gmra.mxu0 %v402
      %v495 = vpop.f32.mrf.mxu0
      %v496 = vadd.f32 %v421, %v495
      %v497 = vpop.f32.mrf.mxu0
      %v498 = vadd.f32 %v421, %v497
      %499 = vdwg.mxu0
      %v500 = vmax.f32 %v481, 0.0
      %v501 = vmax.f32 %v483, 0.0
      %v502 = vmax.f32 %v486, 0.0
      %v503 = vmax.f32 %v488, 0.0
      %v504 = vmax.f32 %v491, 0.0
      %v505 = vmax.f32 %v493, 0.0
      %v506 = vmax.f32 %v496, 0.0
      %v507 = vmax.f32 %v498, 0.0
      %v508 = vpack.c.bf16 %v501, %v500
      %v509 = vpack.c.bf16 %v503, %v502
      %v510 = vpack.c.bf16 %v505, %v504
      %v511 = vpack.c.bf16 %v507, %v506
      %v512 = vld [vmem:[%s5] sm:$0xf]
      %v513 = vld [vmem:[%s5 + $0x4] sm:$0xf]
      %v514 = vld [vmem:[%s5 + $0x8] sm:$0xf]
      %v515 = vld [vmem:[%s5 + $0xc] sm:$0xf]
      %v516 = vld [vmem:[%s5 + $0x10] sm:$0xf]
      %v517 = vld [vmem:[%s5 + $0x14] sm:$0xf]
      %v518 = vld [vmem:[%s5 + $0x18] sm:$0xf]
      %v519 = vld [vmem:[%s5 + $0x1c] sm:$0xf]
      %v520 = vld [vmem:[%s5 + $0x20] sm:$0xf]
      %v521 = vld [vmem:[%s5 + $0x24] sm:$0xf]
      %v522 = vld [vmem:[%s5 + $0x28] sm:$0xf]
      %v523 = vld [vmem:[%s5 + $0x2c] sm:$0xf]
      %v524 = vld [vmem:[%s5 + $0x30] sm:$0xf]
      %v525 = vld [vmem:[%s5 + $0x34] sm:$0xf]
      %v526 = vld [vmem:[%s5 + $0x38] sm:$0xf]
      %v527 = vld [vmem:[%s5 + $0x3c] sm:$0xf]
      %v528 = vld [vmem:[%s6] sm:$0x1]
      %v530 = vperm.slane %v528, 0
      %v548 = vunpack.c.l.b16 %v512
      %v549 = vunpack.c.l.b16 %v513
      %v550 = vunpack.c.l.b16 %v514
      %v551 = vunpack.c.l.b16 %v515
      %v552 = vunpack.c.l.b16 %v516
      %v553 = vunpack.c.l.b16 %v517
      %v554 = vunpack.c.l.b16 %v518
      %v555 = vunpack.c.l.b16 %v519
      %v556 = vunpack.c.l.b16 %v520
      %v557 = vunpack.c.l.b16 %v521
      %v558 = vunpack.c.l.b16 %v522
      %v559 = vunpack.c.l.b16 %v523
      %v560 = vunpack.c.l.b16 %v524
      %v561 = vunpack.c.l.b16 %v525
      %v562 = vunpack.c.l.b16 %v526
      %v563 = vunpack.c.l.b16 %v527
      %v564 = vpack.c.b16 %v549, %v548
      %v565 = vpack.c.b16 %v551, %v550
      %v566 = vpack.c.b16 %v553, %v552
      %v567 = vpack.c.b16 %v555, %v554
      %v568 = vpack.c.b16 %v557, %v556
      %v569 = vpack.c.b16 %v559, %v558
      %v570 = vpack.c.b16 %v561, %v560
      %v571 = vpack.c.b16 %v563, %v562
      %580 = vmatpush.bf16.msra.mxu0 %v571
      %581 = vmatpush.bf16.msra.mxu0 %v570
      %582 = vmatpush.bf16.msra.mxu0 %v569
      %583 = vmatpush.bf16.msra.mxu0 %v568
      %584 = vmatpush.bf16.msra.mxu0 %v567
      %585 = vmatpush.bf16.msra.mxu0 %v566
      %586 = vmatpush.bf16.msra.mxu0 %v565
      %587 = vmatpush.bf16.msra.mxu0 %v564
      %588 = vmatmul.bf16.gmra.mxu0 %v508
      %v589 = vpop.f32.mrf.mxu0
      %v590 = vadd.f32 %v530, %v589
      %v591 = vpop.f32.mrf.mxu0
      %v592 = vadd.f32 %v530, %v591
      %593 = vmatmul.bf16.gmra.mxu0 %v509
      %v594 = vpop.f32.mrf.mxu0
      %v595 = vadd.f32 %v530, %v594
      %v596 = vpop.f32.mrf.mxu0
      %v597 = vadd.f32 %v530, %v596
      %598 = vmatmul.bf16.gmra.mxu0 %v510
      %v599 = vpop.f32.mrf.mxu0
      %v600 = vadd.f32 %v530, %v599
      %v601 = vpop.f32.mrf.mxu0
      %v602 = vadd.f32 %v530, %v601
      %603 = vmatmul.bf16.gmra.mxu0 %v511
      %v604 = vpop.f32.mrf.mxu0
      %v605 = vadd.f32 %v530, %v604
      %v606 = vpop.f32.mrf.mxu0
      %v607 = vadd.f32 %v530, %v606
      %608 = vdwg.mxu0
      %609 = vst [vmem:[%s280] sm:$0xff] %v590
      %610 = vst [vmem:[%s280 + $0x8] sm:$0xff] %v592
      %611 = vst [vmem:[%s280 + $0x10] sm:$0xff] %v595
      %612 = vst [vmem:[%s280 + $0x18] sm:$0xff] %v597
      %613 = vst [vmem:[%s280 + $0x20] sm:$0xff] %v600
      %614 = vst [vmem:[%s280 + $0x28] sm:$0xff] %v602
      %615 = vst [vmem:[%s280 + $0x30] sm:$0xff] %v605
      %616 = vst [vmem:[%s280 + $0x38] sm:$0xff] %v607
      %s617 = smul.u32 8, %s18
      %p618 = scmp.lt.s32.totalorder %s617, 15
      %s619 = scalar_select %p618, %s617, 15
      %s620 = smul.addr %s619, 8
      %s621 = scalar_lea.vmem %s7, %s620
      // Predicated region
      $region49: #{bnn_forward.9} parent=47 // pred_check
        %p622 = pneg %p188
      $region50: #{bnn_forward.9} parent=47 // pred_check_branch
        %624 = sbr.rel (%p622) target = $region52
      $region51: #{bnn_forward.9} parent=47 // pred_region
        %s625 = smul.u32 8, %s18
      $region52: #{bnn_forward.9} parent=47 // pred_fallthru
        _
    $region48: #{bnn_forward.9} parent=5 // pred_fallthru
      _
    %p626 = scmp.le.s32.totalorder 2, %s13
    // Predicated region
    $region53: #{bnn_forward.9} parent=5 // pred_check
      %p627 = pneg %p626
    $region54: #{bnn_forward.9} parent=5 // pred_check_branch
      %629 = sbr.rel (%p627) target = $region56
    $region55: #{bnn_forward.9} parent=5 // pred_region
      %s630 = ssub.s32 %s13, 2
      // Predicated region
      $region57: #{bnn_forward.9} parent=55 // pred_check
        %p631 = pneg %p194
      $region58: #{bnn_forward.9} parent=55 // pred_check_branch
        %633 = sbr.rel (%p631) target = $region60
      $region59: #{bnn_forward.9} parent=55 // pred_region
        %s634 = smul.u32 8, %s19
        %p635 = scmp.lt.s32.totalorder %s634, 15
        %s636 = scalar_select %p635, %s634, 15
        %s637 = smul.addr %s636, 8
        %s638 = scalar_lea.vmem %s7, %s637
      $region60: #{bnn_forward.9} parent=55 // pred_fallthru
        _
    $region56: #{bnn_forward.9} parent=5 // pred_fallthru
      _
  $region6: #{bnn_forward.9} parent=0 // loop_footer
    %s17 = sadd.s32 1, %s13
  $region7: #{bnn_forward.9} parent=0 // loop_footer_branch
    %12 = sbr.rel target = $region3
  $region8: #{bnn_forward.9} parent=0 // loop_exit
    _

</llo_original>
